<compile_context>
chip_gen: v7x
topology: tpu7x:2x2x1
jax: 0.10.0
libtpu: 0.0.40
codegen_flags: <defaults>
</compile_context>

<pallas_src>
import jax
import jax.numpy as jnp
from jax.experimental import pallas as pl
from jax.experimental.pallas import tpu as pltpu

_LANE = 128
_MAX_COLS = 8192                        # cap on the lane-dense last dim
_TARGET_BLOCK_BYTES = 8 * 1024 * 1024   # ~8 MiB blocks; 4x in flight = 32 MiB
_VMEM_LIMIT_BYTES = 48 * 1024 * 1024    # < 64 MiB/TC (v7x); headroom on v5e/v6e


def _identity_kernel(x_ref, o_ref):
    # Pure pass-through: copy the current VMEM tile to the output tile.
    o_ref[...] = x_ref[...]


def _sublane_multiple(dtype):
    # f32 -> 8, bf16/f16 -> 16, int8/fp8 -> 32 (sub-32-bit dtypes pack sublanes).
    # 64-bit dtypes (rare on TPU) fall back to 8.
    bits = jnp.dtype(dtype).itemsize * 8
    return max(8, (32 // min(bits, 32)) * 8)


def _best_lane_cols(total):
    """Largest multiple of 128 (<= _MAX_COLS) dividing `total`, or 0."""
    for k in range(min(_MAX_COLS, total) // _LANE, 0, -1):
        c = k * _LANE
        if total % c == 0:
            return c
    return 0


def _copy_2d(x2d):
    """Tiled, lane-dense copy of a 2D array into a fresh output buffer."""
    rows, cols = x2d.shape
    dtype = x2d.dtype
    itemsize = jnp.dtype(dtype).itemsize
    pack = _sublane_multiple(dtype)

    # ~8 MiB per block, rounded down to the sublane packing.
    tile_rows = (_TARGET_BLOCK_BYTES // (cols * itemsize)) // pack * pack
    tile_rows = max(tile_rows, pack)
    if tile_rows > rows:
        tile_rows = rows
    # v7x megacore: ensure >= 2 grid steps whenever the row count allows so the
    # "parallel" axis can be sharded across both TensorCores.
    if tile_rows == rows and rows >= 2 * pack:
        tile_rows = min(rows, -(-(rows // 2) // pack) * pack)

    grid = (pl.cdiv(rows, tile_rows),)
    return pl.pallas_call(
        _identity_kernel,
        out_shape=jax.ShapeDtypeStruct((rows, cols), dtype),
        grid=grid,
        in_specs=[pl.BlockSpec((tile_rows, cols), lambda i: (i, 0))],
        out_specs=pl.BlockSpec((tile_rows, cols), lambda i: (i, 0)),
        compiler_params=pltpu.CompilerParams(
            dimension_semantics=("parallel",),
            vmem_limit_bytes=_VMEM_LIMIT_BYTES,
        ),
    )(x2d)


def identity(x):
    """Identity forward pass: return the input itself (zero HBM traffic)."""
    return x


def _identity_copy_impl(x):
    """Identity that materializes a *fresh* buffer via a Pallas copy kernel."""
    orig_shape = x.shape
    total = x.size
    if total == 0:
        return x

    # Widest lane-dense 2D view -> wide unmasked vector stores.
    cols = _best_lane_cols(total)
    if cols:
        return _copy_2d(x.reshape(total // cols, cols)).reshape(orig_shape)

    # Non-128-divisible fallback: run the lane-dense prefix through the kernel
    # and handle the < 128-element tail outside it (no full-array jnp.pad).
    flat = x.reshape(-1)
    main = (total // _LANE) * _LANE
    if main == 0:
        # Tiny array (< 128 elements): not worth a kernel launch.
        return flat.reshape(orig_shape)
    cols = _best_lane_cols(main)
    head = _copy_2d(flat[:main].reshape(main // cols, cols)).reshape(-1)
    return jnp.concatenate([head, flat[main:]]).reshape(orig_shape)


identity_copy = jax.jit(_identity_copy_impl)


if __name__ == "__main__":
    key = jax.random.PRNGKey(0)
    # NCHW input, e.g. batch=2, channels=4, spatial=16x16
    x = jax.random.normal(key, (2, 4, 16, 16), dtype=jnp.float32)

    # Module-faithful path: returns the input itself, no kernel, no traffic.
    y = identity(x)

    # Pallas copy kernel path: fresh buffer with identical contents.
    z = identity_copy(x)
    z = jax.block_until_ready(z)

    assert y.shape == x.shape and y.dtype == x.dtype
    assert z.shape == x.shape and z.dtype == x.dtype
    assert bool(jnp.array_equal(y, x))
    assert bool(jnp.array_equal(z, x))
    print("KERNEL_OK")
</pallas_src>

<mosaic_0001>
module attributes {stable_mosaic.version = 11 : i64} {
  func.func @_identity_kernel(%arg0: i32, %arg1: memref<1x2048xf32, #tpu.memory_space<vmem>>, %arg2: memref<1x2048xf32, #tpu.memory_space<vmem>>) attributes {dimension_semantics = [#tpu.dimension_semantics<parallel>], iteration_bounds = array<i64: 1>, scalar_prefetch = 0 : i64, scratch_operands = 0 : i64, tpu.core_type = #tpu.core_type<tc>, window_params = [{transform_indices = @transform_0, window_bounds = array<i64: 1, 2048>}, {transform_indices = @transform_1, window_bounds = array<i64: 1, 2048>}]} {
    %c0 = arith.constant 0 : index
    %c0_0 = arith.constant 0 : index
    %0 = vector.load %arg1[%c0, %c0_0] : memref<1x2048xf32, #tpu.memory_space<vmem>>, vector<1x2048xf32>
    %c0_1 = arith.constant 0 : index
    %c0_2 = arith.constant 0 : index
    %1 = vector.load %arg2[%c0_1, %c0_2] : memref<1x2048xf32, #tpu.memory_space<vmem>>, vector<1x2048xf32>
    tpu.vector_store %arg2[%c0_1, %c0_2], %0 {strides = array<i32>} : memref<1x2048xf32, #tpu.memory_space<vmem>>, vector<1x2048xf32>,
    return
  }
  func.func @transform_0(%arg0: i32) -> (i32, i32) {
    %c0_i32 = arith.constant 0 : i32
    %c0_i32_0 = arith.constant 0 : i32
    return %arg0, %c0_i32 : i32, i32
  }
  func.func @transform_1(%arg0: i32) -> (i32, i32) {
    %c0_i32 = arith.constant 0 : i32
    %c0_i32_0 = arith.constant 0 : i32
    return %arg0, %c0_i32 : i32, i32
  }
}

</mosaic_0001>

<llo_original>
// kernel: _identity_copy_impl.1
$region0: #{_identity_copy_impl.1}
  #allocation0 [shape = 'u32[]', space=smem, size = 0x4, offset = 0x4, fixed_abs, tag = 'smem constant byte address 0x4 - core index']
  #allocation1 [shape = 'u32[144,128]{1,0:T(1,128)}', space=vmem, size = 0x12000, scoped, tag = 'internal scratch']
  %s0 = inlined_call_operand.vmem [shape: f32[1,2048], index: 0, kind: input, shape index: {}]
  %s1 = inlined_call_operand.vmem [shape: f32[1,2048], index: 1, kind: output, shape index: {}]
  %s2 = sld [smem:[#allocation0]]
  $region14: #{_identity_copy_impl.1} parent=0
    _
  %s4 = ssub.s32 1, %s2
  %s5 = scalar_select 0, %s4, %s2
  // Predicated region
  $region2: #{_identity_copy_impl.1} parent=0 // pred_check
    _
  $region3: #{_identity_copy_impl.1} parent=0 // pred_check_branch
    %7 = sbr.rel (0) target = $region5
  $region4: #{_identity_copy_impl.1} parent=0 // pred_region
    _
  $region5: #{_identity_copy_impl.1} parent=0 // pred_fallthru
    _
  %v8 = vld [vmem:[%s0] sm:$0xff]
  %v9 = vld [vmem:[%s0 + $0x8] sm:$0xff]
  %10 = vst [vmem:[%s1] sm:$0xff] %v8
  %11 = vst [vmem:[%s1 + $0x8] sm:$0xff] %v9
  // Predicated region
  $region6: #{_identity_copy_impl.1} parent=0 // pred_check
    _
  $region7: #{_identity_copy_impl.1} parent=0 // pred_check_branch
    %13 = sbr.rel (0) target = $region9
  $region8: #{_identity_copy_impl.1} parent=0 // pred_region
    _
  $region9: #{_identity_copy_impl.1} parent=0 // pred_fallthru
    _
  // Predicated region
  $region10: #{_identity_copy_impl.1} parent=0 // pred_check
    _
  $region11: #{_identity_copy_impl.1} parent=0 // pred_check_branch
    %15 = sbr.rel (0) target = $region13
  $region12: #{_identity_copy_impl.1} parent=0 // pred_region
    _
  $region13: #{_identity_copy_impl.1} parent=0 // pred_fallthru
    _

</llo_original>
